<compile_context>
chip_gen: v5e
topology: v5e:2x2
jax: 0.10.0
libtpu: 0.0.40
codegen_flags: <defaults>
</compile_context>

<pallas_src>
import math

import jax
import jax.numpy as jnp
from jax import lax
from jax.experimental import pallas as pl
from jax.experimental.pallas import tpu as pltpu


def make_pe_table(d_model: int, max_layer: int = 100) -> jnp.ndarray:
    """Sinusoidal table, identical formula to the PyTorch __init__."""
    assert d_model % 2 == 0, "d_model must be even (same limitation as the PyTorch module)"
    position = jnp.arange(0, max_layer, dtype=jnp.float32)[:, None]            # (L, 1)
    div_term = jnp.exp(
        jnp.arange(0, d_model, 2, dtype=jnp.float32) * (-math.log(10000.0) / d_model)
    )                                                                          # (D/2,)
    pe = jnp.zeros((max_layer, d_model), dtype=jnp.float32)
    pe = pe.at[:, 0::2].set(jnp.sin(position * div_term))
    pe = pe.at[:, 1::2].set(jnp.cos(position * div_term))
    return pe                                                                  # (L, D)


def _round_up(v: int, m: int) -> int:
    return (v + m - 1) // m * m


def _topo_pe_kernel(x_ref, idx_ref, pe_ref, o_ref):
    # x_ref  : (TILE_N, D)  input rows (streamed)
    # idx_ref: (TILE_N, 1)  int32 layer indices for this tile
    # pe_ref : (L_pad, D)   full zero-padded pe table, resident in VMEM
    # o_ref  : (TILE_N, D)  output rows
    tile_n = x_ref.shape[0]
    l_pad = pe_ref.shape[0]

    idx = idx_ref[...]                                                # (TILE_N, 1)
    cols = lax.broadcasted_iota(jnp.int32, (tile_n, l_pad), 1)        # lane iota
    one_hot = (idx == cols).astype(jnp.float32)                       # (TILE_N, L_pad)

    # Exact row-select on the MXU: each one-hot row has a single 1.0, and
    # HIGHEST precision reconstructs the f32 pe values exactly. This tiny
    # matmul hides entirely under the x-tile DMA (kernel is HBM-bound).
    gathered = jnp.dot(one_hot, pe_ref[...],
                       precision=lax.Precision.HIGHEST,
                       preferred_element_type=jnp.float32)            # (TILE_N, D)

    # Add in f32 (v5e VPU has no bf16 ALU), cast only on store.
    o_ref[...] = (x_ref[...].astype(jnp.float32) + gathered).astype(o_ref.dtype)


def topo_layer_encoding(x: jnp.ndarray, layer_index: jnp.ndarray,
                        pe: jnp.ndarray, *, tile_n: int = 1024) -> jnp.ndarray:
    """x: (S, B, D); layer_index: (S, B) int; pe: (max_layer, D) f32."""
    S, B, D = x.shape
    N = S * B

    x_rows = x.reshape(N, D)
    idx = layer_index.reshape(N, 1).astype(jnp.int32)

    # Pad the pe row count to a multiple of 128 so the one-hot contraction dim
    # is lane/sublane friendly. Padded rows are zeros and never selected
    # (indices >= max_layer produce an all-zero one-hot row -> add 0, no OOB DMA).
    L = pe.shape[0]
    L_pad = _round_up(L, 128)
    pe_p = jnp.pad(pe.astype(jnp.float32), ((0, L_pad - L), (0, 0)))

    # Row tile: multiple of 8, capped so double-buffered in+out tiles stay well
    # under the smallest (v5e, 16 MiB) default scoped-VMEM budget.
    max_tile_bytes = 2 * 1024 * 1024
    tn_cap = max(8, (max_tile_bytes // (D * 4)) // 8 * 8)
    tn = min(tile_n, tn_cap, _round_up(N, 8))

    N_pad = _round_up(N, tn)
    if N_pad != N:
        x_rows = jnp.pad(x_rows, ((0, N_pad - N), (0, 0)))
        idx = jnp.pad(idx, ((0, N_pad - N), (0, 0)))

    itemsize = jnp.dtype(x.dtype).itemsize

    out = pl.pallas_call(
        _topo_pe_kernel,
        out_shape=jax.ShapeDtypeStruct((N_pad, D), x.dtype),
        grid=(N_pad // tn,),
        in_specs=[
            pl.BlockSpec((tn, D), lambda i: (i, 0)),       # x rows, streamed
            pl.BlockSpec((tn, 1), lambda i: (i, 0)),       # layer indices per tile
            pl.BlockSpec((L_pad, D), lambda i: (0, 0)),    # pe table, resident (constant block)
        ],
        out_specs=pl.BlockSpec((tn, D), lambda i: (i, 0)),
        compiler_params=pltpu.CompilerParams(
            dimension_semantics=("parallel",),             # independent tiles -> megacore on v7x
        ),
        cost_estimate=pl.CostEstimate(
            flops=N_pad * D + 2 * N_pad * L_pad * D,
            transcendentals=0,
            bytes_accessed=2 * N_pad * D * itemsize + N_pad * 4 + L_pad * D * 4,
        ),
    )(x_rows, idx, pe_p)

    return out[:N].reshape(S, B, D)


if __name__ == "__main__":
    d_model = 32
    max_layer = 100
    seq, batch = 8, 2

    key = jax.random.PRNGKey(0)
    kx, ki = jax.random.split(key)
    x = jax.random.normal(kx, (seq, batch, d_model), dtype=jnp.float32)
    layer_index = jax.random.randint(ki, (seq, batch), 0, max_layer, dtype=jnp.int32)

    pe = make_pe_table(d_model, max_layer)

    out = jax.block_until_ready(topo_layer_encoding(x, layer_index, pe))

    # Pure-JAX reference: x + pe[layer_index]  (matches PyTorch pe[layer_index].view(x.size()))
    ref = x + pe[layer_index]
    assert out.shape == x.shape and out.dtype == x.dtype
    assert jnp.allclose(out, ref, atol=1e-6, rtol=1e-6), "mismatch vs reference"

    print("KERNEL_OK")
</pallas_src>

<mosaic_0001>
module attributes {stable_mosaic.version = 11 : i64} {
  func.func @_topo_pe_kernel(%arg0: i32, %arg1: memref<16x32xf32, #tpu.memory_space<vmem>>, %arg2: memref<16x1xi32, #tpu.memory_space<vmem>>, %arg3: memref<128x32xf32, #tpu.memory_space<vmem>>, %arg4: memref<16x32xf32, #tpu.memory_space<vmem>>) attributes {dimension_semantics = [#tpu.dimension_semantics<parallel>], iteration_bounds = array<i64: 1>, scalar_prefetch = 0 : i64, scratch_operands = 0 : i64, tpu.core_type = #tpu.core_type<tc>, window_params = [{transform_indices = @transform_0, window_bounds = array<i64: 16, 32>}, {transform_indices = @transform_1, window_bounds = array<i64: 16, 1>}, {pipeline_mode = #tpu.pipeline_mode<synchronous>, transform_indices = @transform_2, window_bounds = array<i64: 128, 32>}, {transform_indices = @transform_3, window_bounds = array<i64: 16, 32>}]} {
    %c0 = arith.constant 0 : index
    %c0_0 = arith.constant 0 : index
    %0 = vector.load %arg2[%c0, %c0_0] : memref<16x1xi32, #tpu.memory_space<vmem>>, vector<16x1xi32>
    %1 = tpu.iota {dimensions = array<i32: 1>} : vector<16x128xi32>
    %2 = vector.broadcast %0 : vector<16x1xi32> to vector<16x128xi32>
    %3 = arith.cmpi eq, %2, %1 : vector<16x128xi32>
    %4 = arith.extui %3 : vector<16x128xi1> to vector<16x128xi32>
    %5 = arith.sitofp %4 : vector<16x128xi32> to vector<16x128xf32>
    %c0_1 = arith.constant 0 : index
    %c0_2 = arith.constant 0 : index
    %6 = vector.load %arg3[%c0_1, %c0_2] : memref<128x32xf32, #tpu.memory_space<vmem>>, vector<128x32xf32>
    %cst = arith.constant dense<0.000000e+00> : vector<16x32xf32>
    %7 = tpu.matmul %5, %6, %cst {dimension_numbers = #tpu.dot_dimension_numbers<[1], [0], [0], [1], [0, 0, 1, 1], [], []>, precision = #tpu.contract_precision<fp32>} : vector<16x128xf32>, vector<128x32xf32>, vector<16x32xf32> -> vector<16x32xf32>
    %c0_3 = arith.constant 0 : index
    %c0_4 = arith.constant 0 : index
    %8 = vector.load %arg1[%c0_3, %c0_4] : memref<16x32xf32, #tpu.memory_space<vmem>>, vector<16x32xf32>
    %9 = arith.addf %8, %7 : vector<16x32xf32>
    %c0_5 = arith.constant 0 : index
    %c0_6 = arith.constant 0 : index
    %10 = vector.load %arg4[%c0_5, %c0_6] : memref<16x32xf32, #tpu.memory_space<vmem>>, vector<16x32xf32>
    tpu.vector_store %arg4[%c0_5, %c0_6], %9 {strides = array<i32>} : memref<16x32xf32, #tpu.memory_space<vmem>>, vector<16x32xf32>,
    return
  }
  func.func @transform_0(%arg0: i32) -> (i32, i32) {
    %c0_i32 = arith.constant 0 : i32
    %c0_i32_0 = arith.constant 0 : i32
    return %arg0, %c0_i32 : i32, i32
  }
  func.func @transform_1(%arg0: i32) -> (i32, i32) {
    %c0_i32 = arith.constant 0 : i32
    %c0_i32_0 = arith.constant 0 : i32
    return %arg0, %c0_i32 : i32, i32
  }
  func.func @transform_2(%arg0: i32) -> (i32, i32) {
    %c0_i32 = arith.constant 0 : i32
    %c0_i32_0 = arith.constant 0 : i32
    %c0_i32_1 = arith.constant 0 : i32
    return %c0_i32, %c0_i32_0 : i32, i32
  }
  func.func @transform_3(%arg0: i32) -> (i32, i32) {
    %c0_i32 = arith.constant 0 : i32
    %c0_i32_0 = arith.constant 0 : i32
    return %arg0, %c0_i32 : i32, i32
  }
}

</mosaic_0001>

<llo_original>
// kernel: tpu_custom_call.1
$region0: #{tpu_custom_call.1}
  #allocation0 [shape = 'u32[]', space=smem, size = 0x4, offset = 0x4, fixed_abs, tag = 'smem constant byte address 0x4 - core index']
  #allocation1 [shape = 'u32[72,128]{1,0:T(1,128)}', space=vmem, size = 0x9000, scoped, tag = 'internal scratch']
  %s0 = inlined_call_operand.vmem [shape: f32[16,32], index: 0, kind: input, shape index: {}]
  %s1 = inlined_call_operand.vmem [shape: s32[16,1], index: 1, kind: input, shape index: {}]
  %s2 = inlined_call_operand.vmem [shape: f32[128,32], index: 2, kind: input, shape index: {}]
  %s3 = inlined_call_operand.hbm [shape: f32[16,32], index: 3, kind: output, shape index: {}]
  %s4 = sld [smem:[#allocation0]]
  $region22: #{tpu_custom_call.1} parent=0
    _
  %s6 = ssub.s32 1, %s4
  %s7 = scalar_select 0, %s6, %s4
  $region1: #{tpu_custom_call.1} parent=0
    #allocation2 [shape = 'u8[8192]{0}', space=vmem, size = 0x2000, scoped, tag = 'output window, operand 0, single buffered']
    #allocation3 [shape = 's32[1]{0}', space=sflag, size = 0x4, scoped, tag = 'scoped memory for tpu_custom_call.1']
    %8 = vsyncpa [#allocation3], 0
    // Predicated region
    $region2: #{tpu_custom_call.1} parent=1 // pred_check
      _
    $region3: #{tpu_custom_call.1} parent=1 // pred_check_branch
      %10 = sbr.rel (0) target = $region5
    $region4: #{tpu_custom_call.1} parent=1 // pred_region
      _
    $region5: #{tpu_custom_call.1} parent=1 // pred_fallthru
      _
    // Predicated region
    $region6: #{tpu_custom_call.1} parent=1 // pred_check
      _
    $region7: #{tpu_custom_call.1} parent=1 // pred_check_branch
      %12 = sbr.rel (0) target = $region9
    $region8: #{tpu_custom_call.1} parent=1 // pred_region
      _
    $region9: #{tpu_custom_call.1} parent=1 // pred_fallthru
      _
    // Predicated region
    $region10: #{tpu_custom_call.1} parent=1 // pred_check
      _
    $region11: #{tpu_custom_call.1} parent=1 // pred_check_branch
      %14 = sbr.rel (0) target = $region13
    $region12: #{tpu_custom_call.1} parent=1 // pred_region
      _
    $region13: #{tpu_custom_call.1} parent=1 // pred_fallthru
      _
    %v15 = vld [vmem:[%s1] sm:$0xff]
    %v16 = vld [vmem:[%s1 + $0x8] sm:$0xff]
    %v17 = vlaneseq
    %v18 = vand.u32 %v17, 127
    %19 = vset.pattern.permute.xlu0 0
    %20 = vperm.xlu0 %19, %v15
    %v21 = vpop.permute.xlu0 %20
    %22 = vset.pattern.permute.xlu0 0
    %23 = vperm.xlu0 %22, %v16
    %v24 = vpop.permute.xlu0 %23
    %vm25 = vcmp.eq.s32.totalorder %v21, %v18
    %vm26 = vcmp.eq.s32.totalorder %v24, %v18
    %v27 = vsel %vm25, 1, 0
    %v28 = vsel %vm26, 1, 0
    %v29 = vcvt.s32.f32 %v27
    %v30 = vcvt.s32.f32 %v28
    %v31 = vld [vmem:[%s2] sm:$0xff]
    %v32 = vld [vmem:[%s2 + $0x8] sm:$0xff]
    %v33 = vld [vmem:[%s2 + $0x10] sm:$0xff]
    %v34 = vld [vmem:[%s2 + $0x18] sm:$0xff]
    %v35 = vld [vmem:[%s2 + $0x20] sm:$0xff]
    %v36 = vld [vmem:[%s2 + $0x28] sm:$0xff]
    %v37 = vld [vmem:[%s2 + $0x30] sm:$0xff]
    %v38 = vld [vmem:[%s2 + $0x38] sm:$0xff]
    %v39 = vld [vmem:[%s2 + $0x40] sm:$0xff]
    %v40 = vld [vmem:[%s2 + $0x48] sm:$0xff]
    %v41 = vld [vmem:[%s2 + $0x50] sm:$0xff]
    %v42 = vld [vmem:[%s2 + $0x58] sm:$0xff]
    %v43 = vld [vmem:[%s2 + $0x60] sm:$0xff]
    %v44 = vld [vmem:[%s2 + $0x68] sm:$0xff]
    %v45 = vld [vmem:[%s2 + $0x70] sm:$0xff]
    %v46 = vld [vmem:[%s2 + $0x78] sm:$0xff]
    %v47 = vand.u32 %v46, 4294901760
    %48 = vmatpush.msra.mxu0 %v47
    %v49 = vand.u32 %v45, 4294901760
    %50 = vmatpush.msra.mxu0 %v49
    %v51 = vand.u32 %v44, 4294901760
    %52 = vmatpush.msra.mxu0 %v51
    %v53 = vand.u32 %v43, 4294901760
    %54 = vmatpush.msra.mxu0 %v53
    %v55 = vand.u32 %v42, 4294901760
    %56 = vmatpush.msra.mxu0 %v55
    %v57 = vand.u32 %v41, 4294901760
    %58 = vmatpush.msra.mxu0 %v57
    %v59 = vand.u32 %v40, 4294901760
    %60 = vmatpush.msra.mxu0 %v59
    %v61 = vand.u32 %v39, 4294901760
    %62 = vmatpush.msra.mxu0 %v61
    %v63 = vand.u32 %v38, 4294901760
    %64 = vmatpush.msra.mxu0 %v63
    %v65 = vand.u32 %v37, 4294901760
    %66 = vmatpush.msra.mxu0 %v65
    %v67 = vand.u32 %v36, 4294901760
    %68 = vmatpush.msra.mxu0 %v67
    %v69 = vand.u32 %v35, 4294901760
    %70 = vmatpush.msra.mxu0 %v69
    %v71 = vand.u32 %v34, 4294901760
    %72 = vmatpush.msra.mxu0 %v71
    %v73 = vand.u32 %v33, 4294901760
    %74 = vmatpush.msra.mxu0 %v73
    %v75 = vand.u32 %v32, 4294901760
    %76 = vmatpush.msra.mxu0 %v75
    %v77 = vand.u32 %v31, 4294901760
    %78 = vmatpush.msra.mxu0 %v77
    %v79 = vand.u32 %v29, 4294901760
    %v80 = vsub.f32 %v29, %v79
    %v81 = vand.u32 %v80, 4294901760
    %v82 = vsub.f32 %v80, %v81
    %v83 = vand.u32 %v82, 4294901760
    %84 = vmatmul.f32.gmra.mxu0 %v83
    %v85 = vpop.f32.mrf.mxu0
    %v86 = vadd.f32 0.0, %v85
    %v87 = vand.u32 %v30, 4294901760
    %v88 = vsub.f32 %v30, %v87
    %v89 = vand.u32 %v88, 4294901760
    %v90 = vsub.f32 %v88, %v89
    %v91 = vand.u32 %v90, 4294901760
    %92 = vmatmul.f32.gmra.mxu0 %v91
    %v93 = vpop.f32.mrf.mxu0
    %v94 = vadd.f32 0.0, %v93
    %95 = vdwg.mxu0
    %v96 = vand.u32 %v46, 4294901760
    %v97 = vsub.f32 %v46, %v96
    %v98 = vand.u32 %v97, 4294901760
    %v99 = vsub.f32 %v97, %v98
    %v100 = vand.u32 %v99, 4294901760
    %101 = vmatpush.msra.mxu0 %v100
    %v102 = vand.u32 %v45, 4294901760
    %v103 = vsub.f32 %v45, %v102
    %v104 = vand.u32 %v103, 4294901760
    %v105 = vsub.f32 %v103, %v104
    %v106 = vand.u32 %v105, 4294901760
    %107 = vmatpush.msra.mxu0 %v106
    %v108 = vand.u32 %v44, 4294901760
    %v109 = vsub.f32 %v44, %v108
    %v110 = vand.u32 %v109, 4294901760
    %v111 = vsub.f32 %v109, %v110
    %v112 = vand.u32 %v111, 4294901760
    %113 = vmatpush.msra.mxu0 %v112
    %v114 = vand.u32 %v43, 4294901760
    %v115 = vsub.f32 %v43, %v114
    %v116 = vand.u32 %v115, 4294901760
    %v117 = vsub.f32 %v115, %v116
    %v118 = vand.u32 %v117, 4294901760
    %119 = vmatpush.msra.mxu0 %v118
    %v120 = vand.u32 %v42, 4294901760
    %v121 = vsub.f32 %v42, %v120
    %v122 = vand.u32 %v121, 4294901760
    %v123 = vsub.f32 %v121, %v122
    %v124 = vand.u32 %v123, 4294901760
    %125 = vmatpush.msra.mxu0 %v124
    %v126 = vand.u32 %v41, 4294901760
    %v127 = vsub.f32 %v41, %v126
    %v128 = vand.u32 %v127, 4294901760
    %v129 = vsub.f32 %v127, %v128
    %v130 = vand.u32 %v129, 4294901760
    %131 = vmatpush.msra.mxu0 %v130
    %v132 = vand.u32 %v40, 4294901760
    %v133 = vsub.f32 %v40, %v132
    %v134 = vand.u32 %v133, 4294901760
    %v135 = vsub.f32 %v133, %v134
    %v136 = vand.u32 %v135, 4294901760
    %137 = vmatpush.msra.mxu0 %v136
    %v138 = vand.u32 %v39, 4294901760
    %v139 = vsub.f32 %v39, %v138
    %v140 = vand.u32 %v139, 4294901760
    %v141 = vsub.f32 %v139, %v140
    %v142 = vand.u32 %v141, 4294901760
    %143 = vmatpush.msra.mxu0 %v142
    %v144 = vand.u32 %v38, 4294901760
    %v145 = vsub.f32 %v38, %v144
    %v146 = vand.u32 %v145, 4294901760
    %v147 = vsub.f32 %v145, %v146
    %v148 = vand.u32 %v147, 4294901760
    %149 = vmatpush.msra.mxu0 %v148
    %v150 = vand.u32 %v37, 4294901760
    %v151 = vsub.f32 %v37, %v150
    %v152 = vand.u32 %v151, 4294901760
    %v153 = vsub.f32 %v151, %v152
    %v154 = vand.u32 %v153, 4294901760
    %155 = vmatpush.msra.mxu0 %v154
    %v156 = vand.u32 %v36, 4294901760
    %v157 = vsub.f32 %v36, %v156
    %v158 = vand.u32 %v157, 4294901760
    %v159 = vsub.f32 %v157, %v158
    %v160 = vand.u32 %v159, 4294901760
    %161 = vmatpush.msra.mxu0 %v160
    %v162 = vand.u32 %v35, 4294901760
    %v163 = vsub.f32 %v35, %v162
    %v164 = vand.u32 %v163, 4294901760
    %v165 = vsub.f32 %v163, %v164
    %v166 = vand.u32 %v165, 4294901760
    %167 = vmatpush.msra.mxu0 %v166
    %v168 = vand.u32 %v34, 4294901760
    %v169 = vsub.f32 %v34, %v168
    %v170 = vand.u32 %v169, 4294901760
    %v171 = vsub.f32 %v169, %v170
    %v172 = vand.u32 %v171, 4294901760
    %173 = vmatpush.msra.mxu0 %v172
    %v174 = vand.u32 %v33, 4294901760
    %v175 = vsub.f32 %v33, %v174
    %v176 = vand.u32 %v175, 4294901760
    %v177 = vsub.f32 %v175, %v176
    %v178 = vand.u32 %v177, 4294901760
    %179 = vmatpush.msra.mxu0 %v178
    %v180 = vand.u32 %v32, 4294901760
    %v181 = vsub.f32 %v32, %v180
    %v182 = vand.u32 %v181, 4294901760
    %v183 = vsub.f32 %v181, %v182
    %v184 = vand.u32 %v183, 4294901760
    %185 = vmatpush.msra.mxu0 %v184
    %v186 = vand.u32 %v31, 4294901760
    %v187 = vsub.f32 %v31, %v186
    %v188 = vand.u32 %v187, 4294901760
    %v189 = vsub.f32 %v187, %v188
    %v190 = vand.u32 %v189, 4294901760
    %191 = vmatpush.msra.mxu0 %v190
    %v192 = vand.u32 %v29, 4294901760
    %193 = vmatmul.f32.gmra.mxu0 %v192
    %v194 = vpop.f32.mrf.mxu0
    %v195 = vadd.f32 %v86, %v194
    %v196 = vand.u32 %v30, 4294901760
    %197 = vmatmul.f32.gmra.mxu0 %v196
    %v198 = vpop.f32.mrf.mxu0
    %v199 = vadd.f32 %v94, %v198
    %200 = vdwg.mxu0
    %v201 = vand.u32 %v46, 4294901760
    %v202 = vsub.f32 %v46, %v201
    %203 = vmatpush.msra.mxu0 %v202
    %v204 = vand.u32 %v45, 4294901760
    %v205 = vsub.f32 %v45, %v204
    %206 = vmatpush.msra.mxu0 %v205
    %v207 = vand.u32 %v44, 4294901760
    %v208 = vsub.f32 %v44, %v207
    %209 = vmatpush.msra.mxu0 %v208
    %v210 = vand.u32 %v43, 4294901760
    %v211 = vsub.f32 %v43, %v210
    %212 = vmatpush.msra.mxu0 %v211
    %v213 = vand.u32 %v42, 4294901760
    %v214 = vsub.f32 %v42, %v213
    %215 = vmatpush.msra.mxu0 %v214
    %v216 = vand.u32 %v41, 4294901760
    %v217 = vsub.f32 %v41, %v216
    %218 = vmatpush.msra.mxu0 %v217
    %v219 = vand.u32 %v40, 4294901760
    %v220 = vsub.f32 %v40, %v219
    %221 = vmatpush.msra.mxu0 %v220
    %v222 = vand.u32 %v39, 4294901760
    %v223 = vsub.f32 %v39, %v222
    %224 = vmatpush.msra.mxu0 %v223
    %v225 = vand.u32 %v38, 4294901760
    %v226 = vsub.f32 %v38, %v225
    %227 = vmatpush.msra.mxu0 %v226
    %v228 = vand.u32 %v37, 4294901760
    %v229 = vsub.f32 %v37, %v228
    %230 = vmatpush.msra.mxu0 %v229
    %v231 = vand.u32 %v36, 4294901760
    %v232 = vsub.f32 %v36, %v231
    %233 = vmatpush.msra.mxu0 %v232
    %v234 = vand.u32 %v35, 4294901760
    %v235 = vsub.f32 %v35, %v234
    %236 = vmatpush.msra.mxu0 %v235
    %v237 = vand.u32 %v34, 4294901760
    %v238 = vsub.f32 %v34, %v237
    %239 = vmatpush.msra.mxu0 %v238
    %v240 = vand.u32 %v33, 4294901760
    %v241 = vsub.f32 %v33, %v240
    %242 = vmatpush.msra.mxu0 %v241
    %v243 = vand.u32 %v32, 4294901760
    %v244 = vsub.f32 %v32, %v243
    %245 = vmatpush.msra.mxu0 %v244
    %v246 = vand.u32 %v31, 4294901760
    %v247 = vsub.f32 %v31, %v246
    %248 = vmatpush.msra.mxu0 %v247
    %v249 = vand.u32 %v29, 4294901760
    %v250 = vsub.f32 %v29, %v249
    %251 = vmatmul.f32.gmra.mxu0 %v250
    %v252 = vpop.f32.mrf.mxu0
    %v253 = vadd.f32 %v195, %v252
    %v254 = vand.u32 %v30, 4294901760
    %v255 = vsub.f32 %v30, %v254
    %256 = vmatmul.f32.gmra.mxu0 %v255
    %v257 = vpop.f32.mrf.mxu0
    %v258 = vadd.f32 %v199, %v257
    %259 = vdwg.mxu0
    %v260 = vand.u32 %v46, 4294901760
    %261 = vmatpush.msra.mxu0 %v260
    %v262 = vand.u32 %v45, 4294901760
    %263 = vmatpush.msra.mxu0 %v262
    %v264 = vand.u32 %v44, 4294901760
    %265 = vmatpush.msra.mxu0 %v264
    %v266 = vand.u32 %v43, 4294901760
    %267 = vmatpush.msra.mxu0 %v266
    %v268 = vand.u32 %v42, 4294901760
    %269 = vmatpush.msra.mxu0 %v268
    %v270 = vand.u32 %v41, 4294901760
    %271 = vmatpush.msra.mxu0 %v270
    %v272 = vand.u32 %v40, 4294901760
    %273 = vmatpush.msra.mxu0 %v272
    %v274 = vand.u32 %v39, 4294901760
    %275 = vmatpush.msra.mxu0 %v274
    %v276 = vand.u32 %v38, 4294901760
    %277 = vmatpush.msra.mxu0 %v276
    %v278 = vand.u32 %v37, 4294901760
    %279 = vmatpush.msra.mxu0 %v278
    %v280 = vand.u32 %v36, 4294901760
    %281 = vmatpush.msra.mxu0 %v280
    %v282 = vand.u32 %v35, 4294901760
    %283 = vmatpush.msra.mxu0 %v282
    %v284 = vand.u32 %v34, 4294901760
    %285 = vmatpush.msra.mxu0 %v284
    %v286 = vand.u32 %v33, 4294901760
    %287 = vmatpush.msra.mxu0 %v286
    %v288 = vand.u32 %v32, 4294901760
    %289 = vmatpush.msra.mxu0 %v288
    %v290 = vand.u32 %v31, 4294901760
    %291 = vmatpush.msra.mxu0 %v290
    %v292 = vand.u32 %v29, 4294901760
    %v293 = vsub.f32 %v29, %v292
    %v294 = vand.u32 %v293, 4294901760
    %295 = vmatmul.f32.gmra.mxu0 %v294
    %v296 = vpop.f32.mrf.mxu0
    %v297 = vadd.f32 %v253, %v296
    %v298 = vand.u32 %v30, 4294901760
    %v299 = vsub.f32 %v30, %v298
    %v300 = vand.u32 %v299, 4294901760
    %301 = vmatmul.f32.gmra.mxu0 %v300
    %v302 = vpop.f32.mrf.mxu0
    %v303 = vadd.f32 %v258, %v302
    %304 = vdwg.mxu0
    %v305 = vand.u32 %v46, 4294901760
    %v306 = vsub.f32 %v46, %v305
    %v307 = vand.u32 %v306, 4294901760
    %308 = vmatpush.msra.mxu0 %v307
    %v309 = vand.u32 %v45, 4294901760
    %v310 = vsub.f32 %v45, %v309
    %v311 = vand.u32 %v310, 4294901760
    %312 = vmatpush.msra.mxu0 %v311
    %v313 = vand.u32 %v44, 4294901760
    %v314 = vsub.f32 %v44, %v313
    %v315 = vand.u32 %v314, 4294901760
    %316 = vmatpush.msra.mxu0 %v315
    %v317 = vand.u32 %v43, 4294901760
    %v318 = vsub.f32 %v43, %v317
    %v319 = vand.u32 %v318, 4294901760
    %320 = vmatpush.msra.mxu0 %v319
    %v321 = vand.u32 %v42, 4294901760
    %v322 = vsub.f32 %v42, %v321
    %v323 = vand.u32 %v322, 4294901760
    %324 = vmatpush.msra.mxu0 %v323
    %v325 = vand.u32 %v41, 4294901760
    %v326 = vsub.f32 %v41, %v325
    %v327 = vand.u32 %v326, 4294901760
    %328 = vmatpush.msra.mxu0 %v327
    %v329 = vand.u32 %v40, 4294901760
    %v330 = vsub.f32 %v40, %v329
    %v331 = vand.u32 %v330, 4294901760
    %332 = vmatpush.msra.mxu0 %v331
    %v333 = vand.u32 %v39, 4294901760
    %v334 = vsub.f32 %v39, %v333
    %v335 = vand.u32 %v334, 4294901760
    %336 = vmatpush.msra.mxu0 %v335
    %v337 = vand.u32 %v38, 4294901760
    %v338 = vsub.f32 %v38, %v337
    %v339 = vand.u32 %v338, 4294901760
    %340 = vmatpush.msra.mxu0 %v339
    %v341 = vand.u32 %v37, 4294901760
    %v342 = vsub.f32 %v37, %v341
    %v343 = vand.u32 %v342, 4294901760
    %344 = vmatpush.msra.mxu0 %v343
    %v345 = vand.u32 %v36, 4294901760
    %v346 = vsub.f32 %v36, %v345
    %v347 = vand.u32 %v346, 4294901760
    %348 = vmatpush.msra.mxu0 %v347
    %v349 = vand.u32 %v35, 4294901760
    %v350 = vsub.f32 %v35, %v349
    %v351 = vand.u32 %v350, 4294901760
    %352 = vmatpush.msra.mxu0 %v351
    %v353 = vand.u32 %v34, 4294901760
    %v354 = vsub.f32 %v34, %v353
    %v355 = vand.u32 %v354, 4294901760
    %356 = vmatpush.msra.mxu0 %v355
    %v357 = vand.u32 %v33, 4294901760
    %v358 = vsub.f32 %v33, %v357
    %v359 = vand.u32 %v358, 4294901760
    %360 = vmatpush.msra.mxu0 %v359
    %v361 = vand.u32 %v32, 4294901760
    %v362 = vsub.f32 %v32, %v361
    %v363 = vand.u32 %v362, 4294901760
    %364 = vmatpush.msra.mxu0 %v363
    %v365 = vand.u32 %v31, 4294901760
    %v366 = vsub.f32 %v31, %v365
    %v367 = vand.u32 %v366, 4294901760
    %368 = vmatpush.msra.mxu0 %v367
    %v369 = vand.u32 %v29, 4294901760
    %370 = vmatmul.f32.gmra.mxu0 %v369
    %v371 = vpop.f32.mrf.mxu0
    %v372 = vadd.f32 %v297, %v371
    %v373 = vand.u32 %v30, 4294901760
    %374 = vmatmul.f32.gmra.mxu0 %v373
    %v375 = vpop.f32.mrf.mxu0
    %v376 = vadd.f32 %v303, %v375
    %377 = vdwg.mxu0
    %v378 = vand.u32 %v46, 4294901760
    %379 = vmatpush.msra.mxu0 %v378
    %v380 = vand.u32 %v45, 4294901760
    %381 = vmatpush.msra.mxu0 %v380
    %v382 = vand.u32 %v44, 4294901760
    %383 = vmatpush.msra.mxu0 %v382
    %v384 = vand.u32 %v43, 4294901760
    %385 = vmatpush.msra.mxu0 %v384
    %v386 = vand.u32 %v42, 4294901760
    %387 = vmatpush.msra.mxu0 %v386
    %v388 = vand.u32 %v41, 4294901760
    %389 = vmatpush.msra.mxu0 %v388
    %v390 = vand.u32 %v40, 4294901760
    %391 = vmatpush.msra.mxu0 %v390
    %v392 = vand.u32 %v39, 4294901760
    %393 = vmatpush.msra.mxu0 %v392
    %v394 = vand.u32 %v38, 4294901760
    %395 = vmatpush.msra.mxu0 %v394
    %v396 = vand.u32 %v37, 4294901760
    %397 = vmatpush.msra.mxu0 %v396
    %v398 = vand.u32 %v36, 4294901760
    %399 = vmatpush.msra.mxu0 %v398
    %v400 = vand.u32 %v35, 4294901760
    %401 = vmatpush.msra.mxu0 %v400
    %v402 = vand.u32 %v34, 4294901760
    %403 = vmatpush.msra.mxu0 %v402
    %v404 = vand.u32 %v33, 4294901760
    %405 = vmatpush.msra.mxu0 %v404
    %v406 = vand.u32 %v32, 4294901760
    %407 = vmatpush.msra.mxu0 %v406
    %v408 = vand.u32 %v31, 4294901760
    %409 = vmatpush.msra.mxu0 %v408
    %v410 = vand.u32 %v29, 4294901760
    %411 = vmatmul.f32.gmra.mxu0 %v410
    %v412 = vpop.f32.mrf.mxu0
    %v413 = vadd.f32 %v372, %v412
    %v414 = vand.u32 %v30, 4294901760
    %415 = vmatmul.f32.gmra.mxu0 %v414
    %v416 = vpop.f32.mrf.mxu0
    %v417 = vadd.f32 %v376, %v416
    %418 = vdwg.mxu0
    %v419 = vld [vmem:[%s0] sm:$0xff]
    %v420 = vld [vmem:[%s0 + $0x8] sm:$0xff]
    %v421 = vadd.f32 %v419, %v413
    %v422 = vadd.f32 %v420, %v417
    %vm423 = vcmask 261120
    %424 = vst.msk [vmem:[#allocation2] sm:$0xff] %vm423, %v421
    %425 = vst.msk [vmem:[#allocation2 + $0x8] sm:$0xff] %vm423, %v422
    // Predicated region
    $region14: #{tpu_custom_call.1} parent=1 // pred_check
      _
    $region15: #{tpu_custom_call.1} parent=1 // pred_check_branch
      %427 = sbr.rel (0) target = $region17
    $region16: #{tpu_custom_call.1} parent=1 // pred_region
      %429 = vsyncadd [#allocation3], 0
      %s430 = sshll.u32 [#allocation2], 4
      %s431 = int_to_ptr.vmem [resolvable:$true] %s430
      %s432 = sshll.u32 %s3, 4
      %s433 = int_to_ptr.hbm [resolvable:$true] %s432
      %438 = dma.vmem_to_hbm [thread:$0]  %s431, 256, %s433, [#allocation3], 128, 128, 8
    $region17: #{tpu_custom_call.1} parent=1 // pred_fallthru
      _
    // Predicated region
    $region18: #{tpu_custom_call.1} parent=1 // pred_check
      _
    $region19: #{tpu_custom_call.1} parent=1 // pred_check_branch
      %440 = sbr.rel (0) target = $region21
    $region20: #{tpu_custom_call.1} parent=1 // pred_region
      %442 = dma.done [#allocation3], 256
    $region21: #{tpu_custom_call.1} parent=1 // pred_fallthru
      _
    %443 = vsyncpa [#allocation3], 1

</llo_original>
